<compile_context>
chip_gen: v5e
topology: v5e:2x2
jax: 0.10.0
libtpu: 0.0.40
codegen_flags: <defaults>
</compile_context>

<pallas_src>
import jax
import jax.numpy as jnp
from jax.experimental import pallas as pl
from jax.experimental.pallas import tpu as pltpu


# ----------------------------- small helpers ----------------------------------

def _round_up(x, m):
    return ((x + m - 1) // m) * m


def _pick_th(Ho, Wo, target_m=512):
    """Output-row strip height: keep th*Wo ~= target_m rows of MXU M, prefer th | Ho."""
    cap = max(1, min(Ho, target_m // max(Wo, 1)))
    best = 1
    for t in range(cap, 0, -1):
        if Ho % t == 0:
            best = t
            break
    if best >= max(1, cap // 2):
        return best
    return cap  # accept a few padded rows rather than tiny strips


def fold_bn(bn):
    scale = bn["gamma"] / jnp.sqrt(bn["var"] + bn["eps"])
    bias = bn["beta"] - bn["mean"] * scale
    return scale, bias


def _space_to_depth2(xp):
    """(N, Hp, Wp, C) with Hp, Wp even -> (N, Hp//2, Wp//2, 4C), channel order (r, v, c)."""
    N, Hp, Wp, C = xp.shape
    x6 = xp.reshape(N, Hp // 2, 2, Wp // 2, 2, C)
    x6 = jnp.transpose(x6, (0, 1, 3, 2, 4, 5))
    return x6.reshape(N, Hp // 2, Wp // 2, 4 * C)


def _weights_s2d(w_oihw):
    """3x3 stride-2 conv weight (Cout, Cin, 3, 3) -> 2x2 stride-1 taps (4, 4*Cin, Cout)."""
    Cout, Cin, _, _ = w_oihw.shape
    wt = jnp.transpose(w_oihw, (2, 3, 1, 0)).astype(jnp.float32)   # (kh, kw, Cin, Cout)
    w4 = jnp.zeros((2, 2, 2, 2, Cin, Cout), jnp.float32)           # [q, u, r, v, c, o]
    for q in range(2):
        for r in range(2):
            kh = 2 * q + r
            if kh > 2:
                continue
            for u in range(2):
                for v in range(2):
                    kw = 2 * u + v
                    if kw > 2:
                        continue
                    w4 = w4.at[q, u, r, v].set(wt[kh, kw])
    return w4.reshape(4, 4 * Cin, Cout)


# ----------------------------- Pallas kernels ---------------------------------

def _make_conv_bn_kernel(taps, th, n_strips, Wo, Cin, Cout, shortcut, Cs, relu):
    """Fused stride-1 KHxKW conv + folded BN (+ residual / 1x1 projection) (+ ReLU).

    Per grid step (one image): loop over output-row strips; per strip accumulate the per-tap
    matmuls a_tap(th*Wo, Cin) @ w_tap(Cin, Cout) in f32, then apply bias / shortcut / ReLU and
    store the strip.  All slices are static + contiguous.
    """
    M = th * Wo

    def _strip(i, x_ref, w_ref, b_ref, extra):
        acc = None
        for t, (kh, kw) in enumerate(taps):
            a = x_ref[0, i * th + kh: i * th + kh + th, kw: kw + Wo, :].reshape(M, Cin)
            d = jnp.dot(a, w_ref[t], preferred_element_type=jnp.float32)
            acc = d if acc is None else acc + d
        out = acc + b_ref[...]                                   # (M, Cout) + (1, Cout)
        if shortcut == "identity":
            (res_ref,) = extra
            res = res_ref[0, i * th:(i + 1) * th, :, :].reshape(M, Cout)
            out = out + res.astype(jnp.float32)
        elif shortcut == "projection":
            xs_ref, ws_ref, bs_ref = extra
            xs = xs_ref[0, i * th:(i + 1) * th, :, :].reshape(M, Cs)
            out = out + jnp.dot(xs, ws_ref[...], preferred_element_type=jnp.float32)
            out = out + bs_ref[...]
        if relu:
            out = jnp.maximum(out, 0.0)
        return out

    if shortcut is None:
        def kernel(x_ref, w_ref, b_ref, o_ref):
            for i in range(n_strips):
                out = _strip(i, x_ref, w_ref, b_ref, ())
                o_ref[0, i * th:(i + 1) * th, :, :] = out.reshape(th, Wo, Cout).astype(o_ref.dtype)
    elif shortcut == "identity":
        def kernel(x_ref, w_ref, b_ref, res_ref, o_ref):
            for i in range(n_strips):
                out = _strip(i, x_ref, w_ref, b_ref, (res_ref,))
                o_ref[0, i * th:(i + 1) * th, :, :] = out.reshape(th, Wo, Cout).astype(o_ref.dtype)
    elif shortcut == "projection":
        def kernel(x_ref, w_ref, b_ref, xs_ref, ws_ref, bs_ref, o_ref):
            for i in range(n_strips):
                out = _strip(i, x_ref, w_ref, b_ref, (xs_ref, ws_ref, bs_ref))
                o_ref[0, i * th:(i + 1) * th, :, :] = out.reshape(th, Wo, Cout).astype(o_ref.dtype)
    else:
        raise ValueError(shortcut)
    return kernel


def conv_bn(xin, w_taps, bias, *, taps, Ho, Ho_pad, Wo, th, out_dtype, relu,
            shortcut=None, res=None, xs=None, ws=None, bs=None):
    """Fused conv+BN(+shortcut)(+ReLU) over a 1-D, batch-parallel grid.

    xin:    (N, Hin, Win, Cin) bf16, already spatially padded (+ space-to-depth for stride 2)
    w_taps: (T, Cin, Cout)     bf16, BN scale folded in; resident in VMEM (constant index_map)
    bias:   (1, Cout)          f32 folded BN bias; resident
    res:    (N, Ho_pad, Wo, Cout) bf16 identity residual (shortcut == "identity")
    xs/ws/bs: strided-gathered input / 1x1 projection weight / BN bias ("projection")
    Returns (N, Ho, Wo, Cout) in out_dtype.
    """
    N, Hin, Win, Cin = xin.shape
    T, Cw, Cout = w_taps.shape
    kh_max = max(kh for kh, _ in taps)
    kw_max = max(kw for _, kw in taps)
    assert Cw == Cin and T == len(taps)
    assert Ho_pad % th == 0
    assert Hin >= Ho_pad + kh_max and Win == Wo + kw_max
    n_strips = Ho_pad // th

    Cs = xs.shape[-1] if shortcut == "projection" else None
    kernel = _make_conv_bn_kernel(taps, th, n_strips, Wo, Cin, Cout, shortcut, Cs, relu)

    in_specs = [
        pl.BlockSpec((1, Hin, Win, Cin), lambda n: (n, 0, 0, 0)),   # one padded image / step
        pl.BlockSpec((T, Cin, Cout), lambda n: (0, 0, 0)),          # weights resident in VMEM
        pl.BlockSpec((1, Cout), lambda n: (0, 0)),                  # folded BN bias resident
    ]
    args = [xin, w_taps, bias]
    if shortcut == "identity":
        in_specs.append(pl.BlockSpec((1, Ho_pad, Wo, Cout), lambda n: (n, 0, 0, 0)))
        args.append(res)
    elif shortcut == "projection":
        in_specs += [
            pl.BlockSpec((1, Ho_pad, Wo, Cs), lambda n: (n, 0, 0, 0)),
            pl.BlockSpec((Cs, Cout), lambda n: (0, 0)),
            pl.BlockSpec((1, Cout), lambda n: (0, 0)),
        ]
        args += [xs, ws, bs]

    out = pl.pallas_call(
        kernel,
        out_shape=jax.ShapeDtypeStruct((N, Ho_pad, Wo, Cout), out_dtype),
        grid=(N,),
        in_specs=in_specs,
        out_specs=pl.BlockSpec((1, Ho_pad, Wo, Cout), lambda n: (n, 0, 0, 0)),
        compiler_params=pltpu.CompilerParams(dimension_semantics=("parallel",)),
    )(*args)
    return out[:, :Ho] if Ho_pad != Ho else out


# ------------------------------- JAX glue ------------------------------------

def prepare_block_params(params, stride):
    """One-time weight/BN prep (hoisted out of the forward path per perf review)."""
    planes, in_planes = params["w1"].shape[0], params["w1"].shape[1]

    s1, b1 = fold_bn(params["bn1"])
    if stride == 1:
        taps1 = [(kh, kw) for kh in range(3) for kw in range(3)]
        w1 = jnp.transpose(params["w1"], (2, 3, 1, 0)).reshape(9, in_planes, planes)
    else:
        taps1 = [(q, u) for q in range(2) for u in range(2)]
        w1 = _weights_s2d(params["w1"])                              # (4, 4*Cin, planes)
    w1 = (w1.astype(jnp.float32) * s1[None, None, :]).astype(jnp.bfloat16)

    s2, b2 = fold_bn(params["bn2"])
    w2 = jnp.transpose(params["w2"], (2, 3, 1, 0)).reshape(9, planes, planes)
    w2 = (w2.astype(jnp.float32) * s2[None, None, :]).astype(jnp.bfloat16)

    prep = {
        "stride": stride, "planes": planes, "in_planes": in_planes,
        "taps1": taps1,
        "w1": w1, "b1": b1.reshape(1, planes).astype(jnp.float32),
        "w2": w2, "b2": b2.reshape(1, planes).astype(jnp.float32),
    }
    if stride != 1 or in_planes != planes:
        ss, bsv = fold_bn(params["bns"])
        ws = jnp.transpose(params["ws"][:, :, 0, 0], (1, 0)).astype(jnp.float32) * ss[None, :]
        prep["shortcut"] = "projection"
        prep["ws"] = ws.astype(jnp.bfloat16)                         # (Cin, planes)
        prep["bs"] = bsv.reshape(1, planes).astype(jnp.float32)
    else:
        prep["shortcut"] = "identity"
    return prep


def basic_block_forward(x_nchw, prep):
    """Pallas implementation of BasicBlock.forward. Input/output are NCHW like PyTorch."""
    stride, planes = prep["stride"], prep["planes"]
    x = jnp.transpose(x_nchw, (0, 2, 3, 1)).astype(jnp.bfloat16)     # NHWC bf16 activations
    N, H, W, Cin = x.shape
    Ho = (H + 2 - 3) // stride + 1
    Wo = (W + 2 - 3) // stride + 1

    # ---- conv1 (+bn1 +relu), fused taps in-kernel ----
    th1 = _pick_th(Ho, Wo)
    Ho_pad1 = _round_up(Ho, th1)
    if stride == 1:
        xin1 = jnp.pad(x, ((0, 0), (1, 1 + (Ho_pad1 - Ho)), (1, 1), (0, 0)))
    else:
        xp = jnp.pad(x, ((0, 0), (1, 1), (1, 1), (0, 0)))
        Hp, Wp = xp.shape[1], xp.shape[2]
        xp = jnp.pad(xp, ((0, 0), (0, Hp % 2), (0, Wp % 2), (0, 0)))  # even dims for s2d
        xin1 = _space_to_depth2(xp)                                   # (N, Ho+1, Wo+1, 4*Cin)
        if Ho_pad1 > Ho:
            xin1 = jnp.pad(xin1, ((0, 0), (0, Ho_pad1 - Ho), (0, 0), (0, 0)))
    out1 = conv_bn(xin1, prep["w1"], prep["b1"], taps=prep["taps1"],
                   Ho=Ho, Ho_pad=Ho_pad1, Wo=Wo, th=th1,
                   out_dtype=jnp.bfloat16, relu=True)                 # (N, Ho, Wo, planes) bf16

    # ---- conv2 (+bn2) + fused shortcut + relu ----
    taps2 = [(kh, kw) for kh in range(3) for kw in range(3)]
    th2 = _pick_th(Ho, Wo)
    Ho_pad2 = _round_up(Ho, th2)
    xin2 = jnp.pad(out1, ((0, 0), (1, 1 + (Ho_pad2 - Ho)), (1, 1), (0, 0)))

    if prep["shortcut"] == "projection":
        xs = x[:, ::stride, ::stride, :]                              # (N, Ho, Wo, Cin) bf16
        if Ho_pad2 > Ho:
            xs = jnp.pad(xs, ((0, 0), (0, Ho_pad2 - Ho), (0, 0), (0, 0)))
        out2 = conv_bn(xin2, prep["w2"], prep["b2"], taps=taps2,
                       Ho=Ho, Ho_pad=Ho_pad2, Wo=Wo, th=th2,
                       out_dtype=jnp.float32, relu=True,
                       shortcut="projection", xs=xs, ws=prep["ws"], bs=prep["bs"])
    else:
        res = x                                                       # identity: (N, Ho, Wo, planes)
        if Ho_pad2 > Ho:
            res = jnp.pad(res, ((0, 0), (0, Ho_pad2 - Ho), (0, 0), (0, 0)))
        out2 = conv_bn(xin2, prep["w2"], prep["b2"], taps=taps2,
                       Ho=Ho, Ho_pad=Ho_pad2, Wo=Wo, th=th2,
                       out_dtype=jnp.float32, relu=True,
                       shortcut="identity", res=res)

    return jnp.transpose(out2, (0, 3, 1, 2))                          # back to NCHW


# ------------------------- Reference (plain JAX) ------------------------------

def _ref_forward(x, params, stride):
    def conv(x, w, s, pad):
        return jax.lax.conv_general_dilated(
            x, w, (s, s), [(pad, pad), (pad, pad)],
            dimension_numbers=("NCHW", "OIHW", "NCHW"))

    def bn(x, p):
        sc, bi = fold_bn(p)
        return x * sc[None, :, None, None] + bi[None, :, None, None]

    out = jax.nn.relu(bn(conv(x, params["w1"], stride, 1), params["bn1"]))
    out = bn(conv(out, params["w2"], 1, 1), params["bn2"])
    Cin, planes = params["w1"].shape[1], params["w1"].shape[0]
    if stride != 1 or Cin != planes:
        sc = bn(conv(x, params["ws"], stride, 0), params["bns"])
    else:
        sc = x
    return jax.nn.relu(out + sc)


# --------------------------------- main ---------------------------------------

def _init_bn(key, c, eps=1e-5):
    k1, k2, k3, k4 = jax.random.split(key, 4)
    return {
        "gamma": 1.0 + 0.1 * jax.random.normal(k1, (c,), jnp.float32),
        "beta": 0.1 * jax.random.normal(k2, (c,), jnp.float32),
        "mean": 0.1 * jax.random.normal(k3, (c,), jnp.float32),
        "var": 1.0 + 0.1 * jax.random.uniform(k4, (c,), jnp.float32),
        "eps": jnp.float32(eps),
    }


if __name__ == "__main__":
    key = jax.random.PRNGKey(0)

    configs = [
        # projection shortcut (stride 2, channel change) -- primary shapes
        dict(in_planes=4, planes=8, stride=2, N=2, H=16, W=16),
        # identity shortcut (stride 1, same channels)
        dict(in_planes=8, planes=8, stride=1, N=2, H=16, W=16),
    ]

    for cfg in configs:
        key, kx, kw1, kw2, kws, kb1, kb2, kbs = jax.random.split(key, 8)
        N, H, W = cfg["N"], cfg["H"], cfg["W"]
        in_planes, planes, stride = cfg["in_planes"], cfg["planes"], cfg["stride"]

        x = jax.random.normal(kx, (N, in_planes, H, W), jnp.float32)
        params = {
            "w1": 0.2 * jax.random.normal(kw1, (planes, in_planes, 3, 3), jnp.float32),
            "w2": 0.2 * jax.random.normal(kw2, (planes, planes, 3, 3), jnp.float32),
            "bn1": _init_bn(kb1, planes),
            "bn2": _init_bn(kb2, planes),
        }
        if stride != 1 or in_planes != planes:
            params["ws"] = 0.2 * jax.random.normal(kws, (planes, in_planes, 1, 1), jnp.float32)
            params["bns"] = _init_bn(kbs, planes)

        prep = prepare_block_params(params, stride)         # one-time weight/BN prep
        out = jax.block_until_ready(basic_block_forward(x, prep))
        ref = jax.block_until_ready(_ref_forward(x, params, stride))

        Ho = (H + 2 - 3) // stride + 1
        Wo = (W + 2 - 3) // stride + 1
        assert out.shape == ref.shape == (N, planes, Ho, Wo)
        max_err = float(jnp.max(jnp.abs(out - ref)))
        # Tolerance accommodates bf16 activations/weights (accumulation is f32).
        assert jnp.allclose(out, ref, rtol=5e-2, atol=5e-2), max_err

    print("KERNEL_OK")
</pallas_src>

<mosaic_0001>
module attributes {stable_mosaic.version = 11 : i64} {
  func.func @kernel(%arg0: i32, %arg1: memref<1x9x9x16xbf16, #tpu.memory_space<vmem>>, %arg2: memref<4x16x8xbf16, #tpu.memory_space<vmem>>, %arg3: memref<1x8xf32, #tpu.memory_space<vmem>>, %arg4: memref<1x8x8x8xbf16, #tpu.memory_space<vmem>>) attributes {dimension_semantics = [#tpu.dimension_semantics<parallel>], iteration_bounds = array<i64: 2>, scalar_prefetch = 0 : i64, scratch_operands = 0 : i64, tpu.core_type = #tpu.core_type<tc>, window_params = [{transform_indices = @transform_0, window_bounds = array<i64: 1, 9, 9, 16>}, {pipeline_mode = #tpu.pipeline_mode<synchronous>, transform_indices = @transform_1, window_bounds = array<i64: 4, 16, 8>}, {pipeline_mode = #tpu.pipeline_mode<synchronous>, transform_indices = @transform_2, window_bounds = array<i64: 1, 8>}, {transform_indices = @transform_3, window_bounds = array<i64: 1, 8, 8, 8>}]} {
    %c0 = arith.constant 0 : index
    %c0_0 = arith.constant 0 : index
    %c0_1 = arith.constant 0 : index
    %c0_2 = arith.constant 0 : index
    %0 = vector.load %arg1[%c0, %c0_0, %c0_1, %c0_2] : memref<1x9x9x16xbf16, #tpu.memory_space<vmem>>, vector<1x8x8x16xbf16>
    %1 = vector.shape_cast %0 : vector<1x8x8x16xbf16> to vector<8x8x16xbf16>
    %2 = vector.shape_cast %1 : vector<8x8x16xbf16> to vector<64x16xbf16>
    %c0_3 = arith.constant 0 : index
    %c0_4 = arith.constant 0 : index
    %c0_5 = arith.constant 0 : index
    %3 = vector.load %arg2[%c0_3, %c0_4, %c0_5] : memref<4x16x8xbf16, #tpu.memory_space<vmem>>, vector<1x16x8xbf16>
    %4 = vector.shape_cast %3 : vector<1x16x8xbf16> to vector<16x8xbf16>
    %cst = arith.constant dense<0.000000e+00> : vector<64x8xf32>
    %5 = tpu.matmul %2, %4, %cst {dimension_numbers = #tpu.dot_dimension_numbers<[1], [0], [0], [1], [0, 0, 1, 1], [], []>} : vector<64x16xbf16>, vector<16x8xbf16>, vector<64x8xf32> -> vector<64x8xf32>
    %c0_6 = arith.constant 0 : index
    %c0_7 = arith.constant 0 : index
    %c1 = arith.constant 1 : index
    %c0_8 = arith.constant 0 : index
    %6 = vector.load %arg1[%c0_6, %c0_7, %c1, %c0_8] : memref<1x9x9x16xbf16, #tpu.memory_space<vmem>>, vector<1x8x8x16xbf16>
    %7 = vector.shape_cast %6 : vector<1x8x8x16xbf16> to vector<8x8x16xbf16>
    %8 = vector.shape_cast %7 : vector<8x8x16xbf16> to vector<64x16xbf16>
    %c1_9 = arith.constant 1 : index
    %c0_10 = arith.constant 0 : index
    %c0_11 = arith.constant 0 : index
    %9 = vector.load %arg2[%c1_9, %c0_10, %c0_11] : memref<4x16x8xbf16, #tpu.memory_space<vmem>>, vector<1x16x8xbf16>
    %10 = vector.shape_cast %9 : vector<1x16x8xbf16> to vector<16x8xbf16>
    %cst_12 = arith.constant dense<0.000000e+00> : vector<64x8xf32>
    %11 = tpu.matmul %8, %10, %cst_12 {dimension_numbers = #tpu.dot_dimension_numbers<[1], [0], [0], [1], [0, 0, 1, 1], [], []>} : vector<64x16xbf16>, vector<16x8xbf16>, vector<64x8xf32> -> vector<64x8xf32>
    %12 = arith.addf %5, %11 : vector<64x8xf32>
    %c0_13 = arith.constant 0 : index
    %c1_14 = arith.constant 1 : index
    %c0_15 = arith.constant 0 : index
    %c0_16 = arith.constant 0 : index
    %13 = vector.load %arg1[%c0_13, %c1_14, %c0_15, %c0_16] : memref<1x9x9x16xbf16, #tpu.memory_space<vmem>>, vector<1x8x8x16xbf16>
    %14 = vector.shape_cast %13 : vector<1x8x8x16xbf16> to vector<8x8x16xbf16>
    %15 = vector.shape_cast %14 : vector<8x8x16xbf16> to vector<64x16xbf16>
    %c2 = arith.constant 2 : index
    %c0_17 = arith.constant 0 : index
    %c0_18 = arith.constant 0 : index
    %16 = vector.load %arg2[%c2, %c0_17, %c0_18] : memref<4x16x8xbf16, #tpu.memory_space<vmem>>, vector<1x16x8xbf16>
    %17 = vector.shape_cast %16 : vector<1x16x8xbf16> to vector<16x8xbf16>
    %cst_19 = arith.constant dense<0.000000e+00> : vector<64x8xf32>
    %18 = tpu.matmul %15, %17, %cst_19 {dimension_numbers = #tpu.dot_dimension_numbers<[1], [0], [0], [1], [0, 0, 1, 1], [], []>} : vector<64x16xbf16>, vector<16x8xbf16>, vector<64x8xf32> -> vector<64x8xf32>
    %19 = arith.addf %12, %18 : vector<64x8xf32>
    %c0_20 = arith.constant 0 : index
    %c1_21 = arith.constant 1 : index
    %c1_22 = arith.constant 1 : index
    %c0_23 = arith.constant 0 : index
    %20 = vector.load %arg1[%c0_20, %c1_21, %c1_22, %c0_23] : memref<1x9x9x16xbf16, #tpu.memory_space<vmem>>, vector<1x8x8x16xbf16>
    %21 = vector.shape_cast %20 : vector<1x8x8x16xbf16> to vector<8x8x16xbf16>
    %22 = vector.shape_cast %21 : vector<8x8x16xbf16> to vector<64x16xbf16>
    %c3 = arith.constant 3 : index
    %c0_24 = arith.constant 0 : index
    %c0_25 = arith.constant 0 : index
    %23 = vector.load %arg2[%c3, %c0_24, %c0_25] : memref<4x16x8xbf16, #tpu.memory_space<vmem>>, vector<1x16x8xbf16>
    %24 = vector.shape_cast %23 : vector<1x16x8xbf16> to vector<16x8xbf16>
    %cst_26 = arith.constant dense<0.000000e+00> : vector<64x8xf32>
    %25 = tpu.matmul %22, %24, %cst_26 {dimension_numbers = #tpu.dot_dimension_numbers<[1], [0], [0], [1], [0, 0, 1, 1], [], []>} : vector<64x16xbf16>, vector<16x8xbf16>, vector<64x8xf32> -> vector<64x8xf32>
    %26 = arith.addf %19, %25 : vector<64x8xf32>
    %c0_27 = arith.constant 0 : index
    %c0_28 = arith.constant 0 : index
    %27 = vector.load %arg3[%c0_27, %c0_28] : memref<1x8xf32, #tpu.memory_space<vmem>>, vector<1x8xf32>
    %28 = vector.broadcast %27 : vector<1x8xf32> to vector<64x8xf32>
    %29 = arith.addf %26, %28 : vector<64x8xf32>
    %cst_29 = arith.constant 0.000000e+00 : f32
    %30 = vector.broadcast %cst_29 : f32 to vector<64x8xf32>
    %31 = arith.maximumf %29, %30 : vector<64x8xf32>
    %32 = vector.shape_cast %31 : vector<64x8xf32> to vector<8x8x8xf32>
    %33 = arith.truncf %32 : vector<8x8x8xf32> to vector<8x8x8xbf16>
    %c0_30 = arith.constant 0 : index
    %c0_31 = arith.constant 0 : index
    %c0_32 = arith.constant 0 : index
    %c0_33 = arith.constant 0 : index
    %34 = vector.load %arg4[%c0_30, %c0_31, %c0_32, %c0_33] : memref<1x8x8x8xbf16, #tpu.memory_space<vmem>>, vector<1x8x8x8xbf16>
    %35 = vector.shape_cast %34 : vector<1x8x8x8xbf16> to vector<8x8x8xbf16>
    %36 = vector.shape_cast %33 : vector<8x8x8xbf16> to vector<1x8x8x8xbf16>
    tpu.vector_store %arg4[%c0_30, %c0_31, %c0_32, %c0_33], %36 {strides = array<i32>} : memref<1x8x8x8xbf16, #tpu.memory_space<vmem>>, vector<1x8x8x8xbf16>,
    return
  }
  func.func @transform_0(%arg0: i32) -> (i32, i32, i32, i32) {
    %c0_i32 = arith.constant 0 : i32
    %c0_i32_0 = arith.constant 0 : i32
    %c0_i32_1 = arith.constant 0 : i32
    %c0_i32_2 = arith.constant 0 : i32
    return %arg0, %c0_i32, %c0_i32_0, %c0_i32_1 : i32, i32, i32, i32
  }
  func.func @transform_1(%arg0: i32) -> (i32, i32, i32) {
    %c0_i32 = arith.constant 0 : i32
    %c0_i32_0 = arith.constant 0 : i32
    %c0_i32_1 = arith.constant 0 : i32
    %c0_i32_2 = arith.constant 0 : i32
    return %c0_i32, %c0_i32_0, %c0_i32_1 : i32, i32, i32
  }
  func.func @transform_2(%arg0: i32) -> (i32, i32) {
    %c0_i32 = arith.constant 0 : i32
    %c0_i32_0 = arith.constant 0 : i32
    %c0_i32_1 = arith.constant 0 : i32
    return %c0_i32, %c0_i32_0 : i32, i32
  }
  func.func @transform_3(%arg0: i32) -> (i32, i32, i32, i32) {
    %c0_i32 = arith.constant 0 : i32
    %c0_i32_0 = arith.constant 0 : i32
    %c0_i32_1 = arith.constant 0 : i32
    %c0_i32_2 = arith.constant 0 : i32
    return %arg0, %c0_i32, %c0_i32_0, %c0_i32_1 : i32, i32, i32, i32
  }
}

</mosaic_0001>

<llo_original>
// kernel: tpu_custom_call.1
$region0: #{tpu_custom_call.1}
  #allocation0 [shape = 'u32[]', space=smem, size = 0x4, offset = 0x4, fixed_abs, tag = 'smem constant byte address 0x4 - core index']
  #allocation1 [shape = 'u32[72,128]{1,0:T(1,128)}', space=vmem, size = 0x9000, scoped, tag = 'internal scratch']
  %s0 = inlined_call_operand.vmem [shape: bf16[2,9,9,16], index: 0, kind: input, shape index: {}]
  %s1 = inlined_call_operand.vmem [shape: bf16[4,16,8], index: 1, kind: input, shape index: {}]
  %s2 = inlined_call_operand.vmem [shape: f32[1,8], index: 2, kind: input, shape index: {}]
  %s3 = inlined_call_operand.hbm [shape: bf16[2,8,8,8], index: 3, kind: output, shape index: {}]
  %s4 = sld [smem:[#allocation0]]
  $region45: #{tpu_custom_call.1} parent=0
    _
  %s6 = ssub.s32 1, %s4
  %s7 = scalar_select 0, %s6, %s4
  $region1: #{tpu_custom_call.1} parent=0
    #allocation2 [shape = 'u8[32768]{0}', space=vmem, size = 0x8000, scoped, tag = 'output window, operand 0']
    #allocation3 [shape = 's32[2]{0}', space=sflag, size = 0x8, scoped, tag = 'scoped memory for tpu_custom_call.1']
    %8 = vsyncpa [#allocation3], 0
    %s9 = scalar_lea.sflag [#allocation3], 1
    %10 = vsyncpa %s9, 0
    loop: start=0, step=1, limit=4
    $region2: #{tpu_custom_call.1} parent=1 // loop_pre_header
      _
    $region3: #{tpu_custom_call.1} parent=1 // loop_header
      %s12 = sphi 0, %s16
      %p13 = scmp.ge.s32.totalorder %s12, 4
      %s22 = sphi 0, %s24
      %s25 = sphi 0, %s22
      %s26 = sphi 0, %s25
      %s42 = sphi 0, %s26
      %s46 = sphi 0, %s46
      %s48 = sphi 0, %s46
      %s49 = sphi 0, %s48
      %s63 = sphi 0, %s49
      %s67 = sphi 0, %s67
      %s69 = sphi 0, %s67
      %s70 = sphi 0, %s69
      %s84 = sphi 0, %s70
      %s90 = sphi 0, %s92
      %s93 = sphi 0, %s90
      %s94 = sphi 0, %s93
      %s110 = sphi 0, %s94
    $region4: #{tpu_custom_call.1} parent=1 // loop_header_branch
      %15 = sbr.rel (%p13) target = $region8
    $region5: #{tpu_custom_call.1} parent=1 // loop_body
      %s17 = ssub.s32 %s12, 1
      %s18 = ssub.s32 %s12, 2
      %s19 = sadd.s32 %s12, 1
      %s20 = ssub.s32 %s12, %s19
      %p21 = scmp.eq.s32.totalorder %s20, 0
      %s23 = sadd.s32 %s22, 1
      %s24 = scalar_select %p21, %s22, %s23
      %p27 = pneg %p21
      %p28 = scmp.eq.s32.totalorder %s12, 1
      %p29 = por %p27, %p28
      %p30 = scmp.ne.s32.totalorder %s22, %s25
      %p31 = scmp.eq.s32.totalorder %s12, 0
      %p32 = por %p30, %p31
      %p33 = scmp.ne.s32.totalorder %s22, %s25
      %p34 = scmp.eq.s32.totalorder %s17, 1
      %p35 = por %p33, %p34
      %p36 = scmp.ne.s32.totalorder %s25, %s26
      %p37 = scmp.eq.s32.totalorder %s17, 0
      %p38 = por %p36, %p37
      %p39 = scmp.ne.s32.totalorder %s25, %s26
      %p40 = scmp.eq.s32.totalorder %s18, 1
      %p41 = por %p39, %p40
      %p43 = scmp.ne.s32.totalorder %s26, %s42
      %p44 = scmp.eq.s32.totalorder %s18, 0
      %p45 = por %p43, %p44
      %s47 = sadd.s32 %s46, 1
      %p50 = scmp.eq.s32.totalorder %s12, 1
      %p51 = scmp.ne.s32.totalorder %s46, %s48
      %p52 = scmp.eq.s32.totalorder %s12, 0
      %p53 = por %p51, %p52
      %p54 = scmp.ne.s32.totalorder %s46, %s48
      %p55 = scmp.eq.s32.totalorder %s17, 1
      %p56 = por %p54, %p55
      %p57 = scmp.ne.s32.totalorder %s48, %s49
      %p58 = scmp.eq.s32.totalorder %s17, 0
      %p59 = por %p57, %p58
      %p60 = scmp.ne.s32.totalorder %s48, %s49
      %p61 = scmp.eq.s32.totalorder %s18, 1
      %p62 = por %p60, %p61
      %p64 = scmp.ne.s32.totalorder %s49, %s63
      %p65 = scmp.eq.s32.totalorder %s18, 0
      %p66 = por %p64, %p65
      %s68 = sadd.s32 %s67, 1
      %p71 = scmp.eq.s32.totalorder %s12, 1
      %p72 = scmp.ne.s32.totalorder %s67, %s69
      %p73 = scmp.eq.s32.totalorder %s12, 0
      %p74 = por %p72, %p73
      %p75 = scmp.ne.s32.totalorder %s67, %s69
      %p76 = scmp.eq.s32.totalorder %s17, 1
      %p77 = por %p75, %p76
      %p78 = scmp.ne.s32.totalorder %s69, %s70
      %p79 = scmp.eq.s32.totalorder %s17, 0
      %p80 = por %p78, %p79
      %p81 = scmp.ne.s32.totalorder %s69, %s70
      %p82 = scmp.eq.s32.totalorder %s18, 1
      %p83 = por %p81, %p82
      %p85 = scmp.ne.s32.totalorder %s70, %s84
      %p86 = scmp.eq.s32.totalorder %s18, 0
      %p87 = por %p85, %p86
      %s88 = ssub.s32 %s12, %s19
      %p89 = scmp.eq.s32.totalorder %s88, 0
      %s91 = sadd.s32 %s90, 1
      %s92 = scalar_select %p89, %s90, %s91
      %p95 = pneg %p89
      %p96 = scmp.eq.s32.totalorder %s12, 1
      %p97 = por %p95, %p96
      %p98 = scmp.ne.s32.totalorder %s90, %s93
      %p99 = scmp.eq.s32.totalorder %s12, 0
      %p100 = por %p98, %p99
      %p101 = scmp.ne.s32.totalorder %s90, %s93
      %p102 = scmp.eq.s32.totalorder %s17, 1
      %p103 = por %p101, %p102
      %p104 = scmp.ne.s32.totalorder %s93, %s94
      %p105 = scmp.eq.s32.totalorder %s17, 0
      %p106 = por %p104, %p105
      %p107 = scmp.ne.s32.totalorder %s93, %s94
      %p108 = scmp.eq.s32.totalorder %s18, 1
      %p109 = por %p107, %p108
      %p111 = scmp.ne.s32.totalorder %s94, %s110
      %p112 = scmp.eq.s32.totalorder %s18, 0
      %p113 = por %p111, %p112
      %p114 = scmp.le.s32.totalorder 1, %s12
      %p115 = scmp.lt.s32.totalorder %s12, 3
      %p116 = pnand %p114, %p115
      %p117 = pneg %p116
      // Predicated region
      $region9: #{tpu_custom_call.1} parent=5 // pred_check
        _
      $region10: #{tpu_custom_call.1} parent=5 // pred_check_branch
        %119 = sbr.rel (%p116) target = $region12
      $region11: #{tpu_custom_call.1} parent=5 // pred_region
        %s120 = ssub.s32 %s12, 1
        // Predicated region
        $region13: #{tpu_custom_call.1} parent=11 // pred_check
          %p121 = pneg %p59
        $region14: #{tpu_custom_call.1} parent=11 // pred_check_branch
          %123 = sbr.rel (%p121) target = $region16
        $region15: #{tpu_custom_call.1} parent=11 // pred_region
          _
        $region16: #{tpu_custom_call.1} parent=11 // pred_fallthru
          _
        // Predicated region
        $region17: #{tpu_custom_call.1} parent=11 // pred_check
          %p124 = pneg %p80
        $region18: #{tpu_custom_call.1} parent=11 // pred_check_branch
          %126 = sbr.rel (%p124) target = $region20
        $region19: #{tpu_custom_call.1} parent=11 // pred_region
          _
        $region20: #{tpu_custom_call.1} parent=11 // pred_fallthru
          _
      $region12: #{tpu_custom_call.1} parent=5 // pred_fallthru
        _
      %p127 = scmp.lt.s32.totalorder %s12, 2
      // Predicated region
      $region21: #{tpu_custom_call.1} parent=5 // pred_check
        %p128 = pneg %p127
      $region22: #{tpu_custom_call.1} parent=5 // pred_check_branch
        %130 = sbr.rel (%p128) target = $region24
      $region23: #{tpu_custom_call.1} parent=5 // pred_region
        // Predicated region
        $region25: #{tpu_custom_call.1} parent=23 // pred_check
          %p131 = pneg %p32
        $region26: #{tpu_custom_call.1} parent=23 // pred_check_branch
          %133 = sbr.rel (%p131) target = $region28
        $region27: #{tpu_custom_call.1} parent=23 // pred_region
          %p134 = scmp.lt.s32.totalorder %s12, 1
          %s135 = scalar_select %p134, %s12, 1
          %s136 = smul.addr %s135, 18
          %s137 = smul.addr %s136, 4
          %s138 = scalar_lea.vmem %s0, %s137
        $region28: #{tpu_custom_call.1} parent=23 // pred_fallthru
          _
      $region24: #{tpu_custom_call.1} parent=5 // pred_fallthru
        _
      %p139 = scmp.le.s32.totalorder 1, %s12
      %p140 = scmp.lt.s32.totalorder %s12, 3
      %p141 = pnand %p139, %p140
      %p142 = pneg %p141
      // Predicated region
      $region29: #{tpu_custom_call.1} parent=5 // pred_check
        _
      $region30: #{tpu_custom_call.1} parent=5 // pred_check_branch
        %144 = sbr.rel (%p141) target = $region32
      $region31: #{tpu_custom_call.1} parent=5 // pred_region
        %s145 = ssub.s32 %s12, 1
        %p146 = scmp.lt.s32.totalorder %s17, 1
        %s147 = scalar_select %p146, %s17, 1
        %s148 = smul.addr %s147, 18
        %s149 = smul.addr %s148, 4
        %s150 = scalar_lea.vmem %s0, %s149
        %p151 = pneg %p38
        %p152 = pneg %p35
        %p153 = pneg %p59
        %p154 = pneg %p56
        %p155 = pneg %p80
        %p156 = pneg %p77
        %p157 = pneg %p106
        %p158 = pneg %p103
        %s159 = sand.u32 %s93, 1
        %s160 = scalar_lea.sflag [#allocation3], %s159
        %s161 = sand.u32 %s93, 1
        %s162 = smul.addr %s161, 32
        %s163 = scalar_lea.vmem [#allocation2], %s162
        %p164 = scmp.lt.s32.totalorder %s17, 1
        %s165 = scalar_select %p164, %s17, 1
        %s166 = smul.addr %s165, 18
        %s167 = smul.addr %s166, 4
        %s168 = scalar_lea.vmem %s0, %s167
        %v170 = vld [vmem:[%s168] sm:$0xf]
        %v171 = vld [vmem:[%s168 + $0x8] sm:$0xf]
        %v172 = vld [vmem:[%s168 + $0x10] sm:$0xf]
        %v173 = vld [vmem:[%s168 + $0x18] sm:$0xf]
        %v174 = vld [vmem:[%s168 + $0x20] sm:$0xf]
        %v175 = vld [vmem:[%s168 + $0x28] sm:$0xf]
        %v176 = vld [vmem:[%s168 + $0x30] sm:$0xf]
        %v177 = vld [vmem:[%s168 + $0x38] sm:$0xf]
        %v178 = vld [vmem:[%s1] sm:$0xf]
        %v179 = vld [vmem:[%s1 + $0x4] sm:$0xf]
        %v180 = vld [vmem:[%s168 + $0x4] sm:$0x1]
        %v181 = vld [vmem:[%s168 + $0xc] sm:$0x1]
        %v182 = vld [vmem:[%s168 + $0x14] sm:$0x1]
        %v183 = vld [vmem:[%s168 + $0x1c] sm:$0x1]
        %v184 = vld [vmem:[%s168 + $0x24] sm:$0x1]
        %v185 = vld [vmem:[%s168 + $0x2c] sm:$0x1]
        %v186 = vld [vmem:[%s168 + $0x34] sm:$0x1]
        %v187 = vld [vmem:[%s168 + $0x3c] sm:$0x1]
        %vm188 = vsmask.f32 3328
        %vm189 = vsmask.f32 7440
        %vm190 = vmor %vm188, %vm189
        %v192 = vshrl.u32 %v170, 16
        %v194 = vrot.slane %v192, 4
        %v195 = vshll.u32 %v170, 16
        %v197 = vrot.slane %v195, 5
        %v198 = vor.u32 %v194, %v197
        %v199 = vrot.slane %v198, 4
        %v201 = vshll.u32 %v180, 16
        %v203 = vrot.slane %v201, 5
        %v204 = vsel %vm190, %v199, %v203
        %v206 = vshrl.u32 %v171, 16
        %v208 = vrot.slane %v206, 4
        %v209 = vshll.u32 %v171, 16
        %v211 = vrot.slane %v209, 5
        %v212 = vor.u32 %v208, %v211
        %v213 = vrot.slane %v212, 4
        %v215 = vshll.u32 %v181, 16
        %v217 = vrot.slane %v215, 5
        %v218 = vsel %vm190, %v213, %v217
        %v220 = vshrl.u32 %v172, 16
        %v222 = vrot.slane %v220, 4
        %v223 = vshll.u32 %v172, 16
        %v225 = vrot.slane %v223, 5
        %v226 = vor.u32 %v222, %v225
        %v227 = vrot.slane %v226, 4
        %v229 = vshll.u32 %v182, 16
        %v231 = vrot.slane %v229, 5
        %v232 = vsel %vm190, %v227, %v231
        %v234 = vshrl.u32 %v173, 16
        %v236 = vrot.slane %v234, 4
        %v237 = vshll.u32 %v173, 16
        %v239 = vrot.slane %v237, 5
        %v240 = vor.u32 %v236, %v239
        %v241 = vrot.slane %v240, 4
        %v243 = vshll.u32 %v183, 16
        %v245 = vrot.slane %v243, 5
        %v246 = vsel %vm190, %v241, %v245
        %v248 = vshrl.u32 %v174, 16
        %v250 = vrot.slane %v248, 4
        %v251 = vshll.u32 %v174, 16
        %v253 = vrot.slane %v251, 5
        %v254 = vor.u32 %v250, %v253
        %v255 = vrot.slane %v254, 4
        %v257 = vshll.u32 %v184, 16
        %v259 = vrot.slane %v257, 5
        %v260 = vsel %vm190, %v255, %v259
        %v262 = vshrl.u32 %v175, 16
        %v264 = vrot.slane %v262, 4
        %v265 = vshll.u32 %v175, 16
        %v267 = vrot.slane %v265, 5
        %v268 = vor.u32 %v264, %v267
        %v269 = vrot.slane %v268, 4
        %v271 = vshll.u32 %v185, 16
        %v273 = vrot.slane %v271, 5
        %v274 = vsel %vm190, %v269, %v273
        %v276 = vshrl.u32 %v176, 16
        %v278 = vrot.slane %v276, 4
        %v279 = vshll.u32 %v176, 16
        %v281 = vrot.slane %v279, 5
        %v282 = vor.u32 %v278, %v281
        %v283 = vrot.slane %v282, 4
        %v285 = vshll.u32 %v186, 16
        %v287 = vrot.slane %v285, 5
        %v288 = vsel %vm190, %v283, %v287
        %v290 = vshrl.u32 %v177, 16
        %v292 = vrot.slane %v290, 4
        %v293 = vshll.u32 %v177, 16
        %v295 = vrot.slane %v293, 5
        %v296 = vor.u32 %v292, %v295
        %v297 = vrot.slane %v296, 4
        %v299 = vshll.u32 %v187, 16
        %v301 = vrot.slane %v299, 5
        %v302 = vsel %vm190, %v297, %v301
        %s303 = scalar_lea.vmem %s1, 8
        %v304 = vld [vmem:[%s303] sm:$0xf]
        %v305 = vld [vmem:[%s303 + $0x4] sm:$0xf]
        %v306 = vunpack.c.l.b16 %v204
        %v307 = vunpack.c.l.b16 %v218
        %v308 = vunpack.c.l.b16 %v232
        %v309 = vunpack.c.l.b16 %v246
        %v310 = vunpack.c.l.b16 %v260
        %v311 = vunpack.c.l.b16 %v274
        %v312 = vunpack.c.l.b16 %v288
        %v313 = vunpack.c.l.b16 %v302
        %v314 = vpack.c.b16 %v307, %v306
        %v315 = vpack.c.b16 %v309, %v308
        %v316 = vpack.c.b16 %v311, %v310
        %v317 = vpack.c.b16 %v313, %v312
        %v320 = vunpack.c.l.b16 %v304
        %v321 = vunpack.c.l.b16 %v305
        %v322 = vpack.c.b16 %v321, %v320
        %vm324 = vcmask 130048
        %v326 = vsel %vm324, %v314, 0
        %v329 = vsel %vm324, %v315, 0
        %v332 = vsel %vm324, %v316, 0
        %v335 = vsel %vm324, %v317, 0
        %337 = vmatpush.bf16.msra.mxu0 0
        %338 = vmatpush.bf16.msra.mxu0 0
        %339 = vmatpush.bf16.msra.mxu0 0
        %340 = vmatpush.bf16.msra.mxu0 0
        %341 = vmatpush.bf16.msra.mxu0 0
        %342 = vmatpush.bf16.msra.mxu0 0
        %343 = vmatpush.bf16.msra.mxu0 0
        %344 = vmatpush.bf16.msra.mxu0 %v322
        %345 = vmatmul.bf16.gmra.mxu0 %v326
        %v346 = vpop.f32.mrf.mxu0
        %v347 = vadd.f32 0.0, %v346
        %v348 = vpop.f32.mrf.mxu0
        %v349 = vadd.f32 0.0, %v348
        %350 = vmatmul.bf16.gmra.mxu0 %v329
        %v351 = vpop.f32.mrf.mxu0
        %v352 = vadd.f32 0.0, %v351
        %v353 = vpop.f32.mrf.mxu0
        %v354 = vadd.f32 0.0, %v353
        %355 = vmatmul.bf16.gmra.mxu0 %v332
        %v356 = vpop.f32.mrf.mxu0
        %v357 = vadd.f32 0.0, %v356
        %v358 = vpop.f32.mrf.mxu0
        %v359 = vadd.f32 0.0, %v358
        %360 = vmatmul.bf16.gmra.mxu0 %v335
        %v361 = vpop.f32.mrf.mxu0
        %v362 = vadd.f32 0.0, %v361
        %v363 = vpop.f32.mrf.mxu0
        %v364 = vadd.f32 0.0, %v363
        %365 = vdwg.mxu0
        %v374 = vunpack.c.l.b16 %v170
        %v375 = vunpack.c.l.b16 %v171
        %v376 = vunpack.c.l.b16 %v172
        %v377 = vunpack.c.l.b16 %v173
        %v378 = vunpack.c.l.b16 %v174
        %v379 = vunpack.c.l.b16 %v175
        %v380 = vunpack.c.l.b16 %v176
        %v381 = vunpack.c.l.b16 %v177
        %v382 = vpack.c.b16 %v375, %v374
        %v383 = vpack.c.b16 %v377, %v376
        %v384 = vpack.c.b16 %v379, %v378
        %v385 = vpack.c.b16 %v381, %v380
        %v388 = vunpack.c.l.b16 %v178
        %v389 = vunpack.c.l.b16 %v179
        %v390 = vpack.c.b16 %v389, %v388
        %v393 = vsel %vm324, %v382, 0
        %v396 = vsel %vm324, %v383, 0
        %v399 = vsel %vm324, %v384, 0
        %v402 = vsel %vm324, %v385, 0
        %404 = vmatpush.bf16.msra.mxu0 0
        %405 = vmatpush.bf16.msra.mxu0 0
        %406 = vmatpush.bf16.msra.mxu0 0
        %407 = vmatpush.bf16.msra.mxu0 0
        %408 = vmatpush.bf16.msra.mxu0 0
        %409 = vmatpush.bf16.msra.mxu0 0
        %410 = vmatpush.bf16.msra.mxu0 0
        %411 = vmatpush.bf16.msra.mxu0 %v390
        %412 = vmatmul.bf16.gmra.mxu0 %v393
        %v413 = vpop.f32.mrf.mxu0
        %v414 = vadd.f32 %v347, %v413
        %v415 = vpop.f32.mrf.mxu0
        %v416 = vadd.f32 %v349, %v415
        %417 = vmatmul.bf16.gmra.mxu0 %v396
        %v418 = vpop.f32.mrf.mxu0
        %v419 = vadd.f32 %v352, %v418
        %v420 = vpop.f32.mrf.mxu0
        %v421 = vadd.f32 %v354, %v420
        %422 = vmatmul.bf16.gmra.mxu0 %v399
        %v423 = vpop.f32.mrf.mxu0
        %v424 = vadd.f32 %v357, %v423
        %v425 = vpop.f32.mrf.mxu0
        %v426 = vadd.f32 %v359, %v425
        %427 = vmatmul.bf16.gmra.mxu0 %v402
        %v428 = vpop.f32.mrf.mxu0
        %v429 = vadd.f32 %v362, %v428
        %v430 = vpop.f32.mrf.mxu0
        %v431 = vadd.f32 %v364, %v430
        %432 = vdwg.mxu0
        %s433 = scalar_lea.vmem %s168, 8
        %v434 = vld [vmem:[%s433] sm:$0xf]
        %v435 = vld [vmem:[%s433 + $0x8] sm:$0xf]
        %v436 = vld [vmem:[%s433 + $0x10] sm:$0xf]
        %v437 = vld [vmem:[%s433 + $0x18] sm:$0xf]
        %v438 = vld [vmem:[%s433 + $0x20] sm:$0xf]
        %v439 = vld [vmem:[%s433 + $0x28] sm:$0xf]
        %v440 = vld [vmem:[%s433 + $0x30] sm:$0xf]
        %v441 = vld [vmem:[%s433 + $0x38] sm:$0xf]
        %s442 = scalar_lea.vmem %s1, 16
        %v443 = vld [vmem:[%s442] sm:$0xf]
        %v444 = vld [vmem:[%s442 + $0x4] sm:$0xf]
        %v453 = vunpack.c.l.b16 %v434
        %v454 = vunpack.c.l.b16 %v435
        %v455 = vunpack.c.l.b16 %v436
        %v456 = vunpack.c.l.b16 %v437
        %v457 = vunpack.c.l.b16 %v438
        %v458 = vunpack.c.l.b16 %v439
        %v459 = vunpack.c.l.b16 %v440
        %v460 = vunpack.c.l.b16 %v441
        %v461 = vpack.c.b16 %v454, %v453
        %v462 = vpack.c.b16 %v456, %v455
        %v463 = vpack.c.b16 %v458, %v457
        %v464 = vpack.c.b16 %v460, %v459
        %v467 = vunpack.c.l.b16 %v443
        %v468 = vunpack.c.l.b16 %v444
        %v469 = vpack.c.b16 %v468, %v467
        %v472 = vsel %vm324, %v461, 0
        %v475 = vsel %vm324, %v462, 0
        %v478 = vsel %vm324, %v463, 0
        %v481 = vsel %vm324, %v464, 0
        %483 = vmatpush.bf16.msra.mxu0 0
        %484 = vmatpush.bf16.msra.mxu0 0
        %485 = vmatpush.bf16.msra.mxu0 0
        %486 = vmatpush.bf16.msra.mxu0 0
        %487 = vmatpush.bf16.msra.mxu0 0
        %488 = vmatpush.bf16.msra.mxu0 0
        %489 = vmatpush.bf16.msra.mxu0 0
        %490 = vmatpush.bf16.msra.mxu0 %v469
        %491 = vmatmul.bf16.gmra.mxu0 %v472
        %v492 = vpop.f32.mrf.mxu0
        %v493 = vadd.f32 0.0, %v492
        %v494 = vpop.f32.mrf.mxu0
        %v495 = vadd.f32 0.0, %v494
        %496 = vmatmul.bf16.gmra.mxu0 %v475
        %v497 = vpop.f32.mrf.mxu0
        %v498 = vadd.f32 0.0, %v497
        %v499 = vpop.f32.mrf.mxu0
        %v500 = vadd.f32 0.0, %v499
        %501 = vmatmul.bf16.gmra.mxu0 %v478
        %v502 = vpop.f32.mrf.mxu0
        %v503 = vadd.f32 0.0, %v502
        %v504 = vpop.f32.mrf.mxu0
        %v505 = vadd.f32 0.0, %v504
        %506 = vmatmul.bf16.gmra.mxu0 %v481
        %v507 = vpop.f32.mrf.mxu0
        %v508 = vadd.f32 0.0, %v507
        %v509 = vpop.f32.mrf.mxu0
        %v510 = vadd.f32 0.0, %v509
        %511 = vdwg.mxu0
        %v512 = vadd.f32 %v414, %v493
        %v513 = vadd.f32 %v416, %v495
        %v514 = vadd.f32 %v419, %v498
        %v515 = vadd.f32 %v421, %v500
        %v516 = vadd.f32 %v424, %v503
        %v517 = vadd.f32 %v426, %v505
        %v518 = vadd.f32 %v429, %v508
        %v519 = vadd.f32 %v431, %v510
        %v520 = vld [vmem:[%s433] sm:$0xf]
        %v521 = vld [vmem:[%s433 + $0x4] sm:$0x1]
        %v522 = vld [vmem:[%s433 + $0x8] sm:$0xf]
        %v523 = vld [vmem:[%s433 + $0xc] sm:$0x1]
        %v524 = vld [vmem:[%s433 + $0x10] sm:$0xf]
        %v525 = vld [vmem:[%s433 + $0x14] sm:$0x1]
        %v526 = vld [vmem:[%s433 + $0x18] sm:$0xf]
        %v527 = vld [vmem:[%s433 + $0x1c] sm:$0x1]
        %v528 = vld [vmem:[%s433 + $0x20] sm:$0xf]
        %v529 = vld [vmem:[%s433 + $0x24] sm:$0x1]
        %v530 = vld [vmem:[%s433 + $0x28] sm:$0xf]
        %v531 = vld [vmem:[%s433 + $0x2c] sm:$0x1]
        %v532 = vld [vmem:[%s433 + $0x30] sm:$0xf]
        %v533 = vld [vmem:[%s433 + $0x34] sm:$0x1]
        %v534 = vld [vmem:[%s433 + $0x38] sm:$0xf]
        %v535 = vld [vmem:[%s433 + $0x3c] sm:$0x1]
        %v537 = vshrl.u32 %v520, 16
        %v539 = vrot.slane %v537, 4
        %v540 = vshll.u32 %v520, 16
        %v542 = vrot.slane %v540, 5
        %v543 = vor.u32 %v539, %v542
        %v544 = vrot.slane %v543, 4
        %v546 = vshll.u32 %v521, 16
        %v548 = vrot.slane %v546, 5
        %v549 = vsel %vm190, %v544, %v548
        %v551 = vshrl.u32 %v522, 16
        %v553 = vrot.slane %v551, 4
        %v554 = vshll.u32 %v522, 16
        %v556 = vrot.slane %v554, 5
        %v557 = vor.u32 %v553, %v556
        %v558 = vrot.slane %v557, 4
        %v560 = vshll.u32 %v523, 16
        %v562 = vrot.slane %v560, 5
        %v563 = vsel %vm190, %v558, %v562
        %v565 = vshrl.u32 %v524, 16
        %v567 = vrot.slane %v565, 4
        %v568 = vshll.u32 %v524, 16
        %v570 = vrot.slane %v568, 5
        %v571 = vor.u32 %v567, %v570
        %v572 = vrot.slane %v571, 4
        %v574 = vshll.u32 %v525, 16
        %v576 = vrot.slane %v574, 5
        %v577 = vsel %vm190, %v572, %v576
        %v579 = vshrl.u32 %v526, 16
        %v581 = vrot.slane %v579, 4
        %v582 = vshll.u32 %v526, 16
        %v584 = vrot.slane %v582, 5
        %v585 = vor.u32 %v581, %v584
        %v586 = vrot.slane %v585, 4
        %v588 = vshll.u32 %v527, 16
        %v590 = vrot.slane %v588, 5
        %v591 = vsel %vm190, %v586, %v590
        %v593 = vshrl.u32 %v528, 16
        %v595 = vrot.slane %v593, 4
        %v596 = vshll.u32 %v528, 16
        %v598 = vrot.slane %v596, 5
        %v599 = vor.u32 %v595, %v598
        %v600 = vrot.slane %v599, 4
        %v602 = vshll.u32 %v529, 16
        %v604 = vrot.slane %v602, 5
        %v605 = vsel %vm190, %v600, %v604
        %v607 = vshrl.u32 %v530, 16
        %v609 = vrot.slane %v607, 4
        %v610 = vshll.u32 %v530, 16
        %v612 = vrot.slane %v610, 5
        %v613 = vor.u32 %v609, %v612
        %v614 = vrot.slane %v613, 4
        %v616 = vshll.u32 %v531, 16
        %v618 = vrot.slane %v616, 5
        %v619 = vsel %vm190, %v614, %v618
        %v621 = vshrl.u32 %v532, 16
        %v623 = vrot.slane %v621, 4
        %v624 = vshll.u32 %v532, 16
        %v626 = vrot.slane %v624, 5
        %v627 = vor.u32 %v623, %v626
        %v628 = vrot.slane %v627, 4
        %v630 = vshll.u32 %v533, 16
        %v632 = vrot.slane %v630, 5
        %v633 = vsel %vm190, %v628, %v632
        %v635 = vshrl.u32 %v534, 16
        %v637 = vrot.slane %v635, 4
        %v638 = vshll.u32 %v534, 16
        %v640 = vrot.slane %v638, 5
        %v641 = vor.u32 %v637, %v640
        %v642 = vrot.slane %v641, 4
        %v644 = vshll.u32 %v535, 16
        %v646 = vrot.slane %v644, 5
        %v647 = vsel %vm190, %v642, %v646
        %s648 = scalar_lea.vmem %s1, 24
        %v649 = vld [vmem:[%s648] sm:$0xf]
        %v650 = vld [vmem:[%s648 + $0x4] sm:$0xf]
        %v651 = vunpack.c.l.b16 %v549
        %v652 = vunpack.c.l.b16 %v563
        %v653 = vunpack.c.l.b16 %v577
        %v654 = vunpack.c.l.b16 %v591
        %v655 = vunpack.c.l.b16 %v605
        %v656 = vunpack.c.l.b16 %v619
        %v657 = vunpack.c.l.b16 %v633
        %v658 = vunpack.c.l.b16 %v647
        %v659 = vpack.c.b16 %v652, %v651
        %v660 = vpack.c.b16 %v654, %v653
        %v661 = vpack.c.b16 %v656, %v655
        %v662 = vpack.c.b16 %v658, %v657
        %v665 = vunpack.c.l.b16 %v649
        %v666 = vunpack.c.l.b16 %v650
        %v667 = vpack.c.b16 %v666, %v665
        %v670 = vsel %vm324, %v659, 0
        %v673 = vsel %vm324, %v660, 0
        %v676 = vsel %vm324, %v661, 0
        %v679 = vsel %vm324, %v662, 0
        %681 = vmatpush.bf16.msra.mxu0 0
        %682 = vmatpush.bf16.msra.mxu0 0
        %683 = vmatpush.bf16.msra.mxu0 0
        %684 = vmatpush.bf16.msra.mxu0 0
        %685 = vmatpush.bf16.msra.mxu0 0
        %686 = vmatpush.bf16.msra.mxu0 0
        %687 = vmatpush.bf16.msra.mxu0 0
        %688 = vmatpush.bf16.msra.mxu0 %v667
        %689 = vmatmul.bf16.gmra.mxu0 %v670
        %v690 = vpop.f32.mrf.mxu0
        %v691 = vadd.f32 0.0, %v690
        %v692 = vpop.f32.mrf.mxu0
        %v693 = vadd.f32 0.0, %v692
        %694 = vmatmul.bf16.gmra.mxu0 %v673
        %v695 = vpop.f32.mrf.mxu0
        %v696 = vadd.f32 0.0, %v695
        %v697 = vpop.f32.mrf.mxu0
        %v698 = vadd.f32 0.0, %v697
        %699 = vmatmul.bf16.gmra.mxu0 %v676
        %v700 = vpop.f32.mrf.mxu0
        %v701 = vadd.f32 0.0, %v700
        %v702 = vpop.f32.mrf.mxu0
        %v703 = vadd.f32 0.0, %v702
        %704 = vmatmul.bf16.gmra.mxu0 %v679
        %v705 = vpop.f32.mrf.mxu0
        %v706 = vadd.f32 0.0, %v705
        %v707 = vpop.f32.mrf.mxu0
        %v708 = vadd.f32 0.0, %v707
        %709 = vdwg.mxu0
        %v710 = vadd.f32 %v512, %v691
        %v711 = vadd.f32 %v513, %v693
        %v712 = vadd.f32 %v514, %v696
        %v713 = vadd.f32 %v515, %v698
        %v714 = vadd.f32 %v516, %v701
        %v715 = vadd.f32 %v517, %v703
        %v716 = vadd.f32 %v518, %v706
        %v717 = vadd.f32 %v519, %v708
        %v718 = vld [vmem:[%s2] sm:$0x1]
        %v720 = vperm.slane %v718, 0
        %v722 = vadd.f32 %v710, %v720
        %v723 = vadd.f32 %v711, %v720
        %v724 = vadd.f32 %v712, %v720
        %v725 = vadd.f32 %v713, %v720
        %v726 = vadd.f32 %v714, %v720
        %v727 = vadd.f32 %v715, %v720
        %v728 = vadd.f32 %v716, %v720
        %v729 = vadd.f32 %v717, %v720
        %v730 = vmax.f32 %v722, 0.0
        %v731 = vmax.f32 %v723, 0.0
        %v732 = vmax.f32 %v724, 0.0
        %v733 = vmax.f32 %v725, 0.0
        %v734 = vmax.f32 %v726, 0.0
        %v735 = vmax.f32 %v727, 0.0
        %v736 = vmax.f32 %v728, 0.0
        %v737 = vmax.f32 %v729, 0.0
        %v738 = vpack.c.bf16 %v730, %v730
        %v739 = vpack.c.bf16 %v731, %v731
        %v740 = vpack.c.bf16 %v732, %v732
        %v741 = vpack.c.bf16 %v733, %v733
        %v742 = vpack.c.bf16 %v734, %v734
        %v743 = vpack.c.bf16 %v735, %v735
        %v744 = vpack.c.bf16 %v736, %v736
        %v745 = vpack.c.bf16 %v737, %v737
        %vm746 = vcmask 60416
        %747 = vst.msk [vmem:[%s163] sm:$0xf] %vm746, %v738
        %748 = vst.msk [vmem:[%s163 + $0x4] sm:$0xf] %vm746, %v739
        %749 = vst.msk [vmem:[%s163 + $0x8] sm:$0xf] %vm746, %v740
        %750 = vst.msk [vmem:[%s163 + $0xc] sm:$0xf] %vm746, %v741
        %751 = vst.msk [vmem:[%s163 + $0x10] sm:$0xf] %vm746, %v742
        %752 = vst.msk [vmem:[%s163 + $0x14] sm:$0xf] %vm746, %v743
        %753 = vst.msk [vmem:[%s163 + $0x18] sm:$0xf] %vm746, %v744
        %754 = vst.msk [vmem:[%s163 + $0x1c] sm:$0xf] %vm746, %v745
        %s755 = sand.u32 %s93, 1
        %s756 = scalar_lea.sflag [#allocation3], %s755
        %s757 = sand.u32 %s93, 1
        %s758 = smul.addr %s757, 32
        %s759 = scalar_lea.vmem [#allocation2], %s758
        // Predicated region
        $region33: #{tpu_custom_call.1} parent=31 // pred_check
          %p760 = pneg %p103
        $region34: #{tpu_custom_call.1} parent=31 // pred_check_branch
          %762 = sbr.rel (%p760) target = $region36
        $region35: #{tpu_custom_call.1} parent=31 // pred_region
          %764 = vsyncadd %s756, 0
          %s765 = smul.addr %s17, 8
          %s766 = smul.addr %s765, 4
          %s767 = scalar_lea.hbm %s3, %s766
          %s768 = sshll.u32 %s759, 4
          %s769 = int_to_ptr.vmem [resolvable:$true] %s768
          %s770 = sshll.u32 %s767, 4
          %s771 = int_to_ptr.hbm [resolvable:$true] %s770
          %776 = dma.vmem_to_hbm [thread:$0]  %s769, 512, %s771, %s756, 64, 64, 4
        $region36: #{tpu_custom_call.1} parent=31 // pred_fallthru
          _
      $region32: #{tpu_custom_call.1} parent=5 // pred_fallthru
        _
      %p777 = scmp.le.s32.totalorder 2, %s12
      // Predicated region
      $region37: #{tpu_custom_call.1} parent=5 // pred_check
        %p778 = pneg %p777
      $region38: #{tpu_custom_call.1} parent=5 // pred_check_branch
        %780 = sbr.rel (%p778) target = $region40
      $region39: #{tpu_custom_call.1} parent=5 // pred_region
        %s781 = ssub.s32 %s12, 2
        // Predicated region
        $region41: #{tpu_custom_call.1} parent=39 // pred_check
          %p782 = pneg %p109
        $region42: #{tpu_custom_call.1} parent=39 // pred_check_branch
          %784 = sbr.rel (%p782) target = $region44
        $region43: #{tpu_custom_call.1} parent=39 // pred_region
          %s785 = sand.u32 %s94, 1
          %s786 = scalar_lea.sflag [#allocation3], %s785
          %s787 = sand.u32 %s94, 1
          %s788 = smul.addr %s787, 32
          %s789 = scalar_lea.vmem [#allocation2], %s788
          %791 = dma.done %s786, 512
        $region44: #{tpu_custom_call.1} parent=39 // pred_fallthru
          _
      $region40: #{tpu_custom_call.1} parent=5 // pred_fallthru
        _
    $region6: #{tpu_custom_call.1} parent=1 // loop_footer
      %s16 = sadd.s32 1, %s12
    $region7: #{tpu_custom_call.1} parent=1 // loop_footer_branch
      %11 = sbr.rel target = $region3
    $region8: #{tpu_custom_call.1} parent=1 // loop_exit
      _
    %792 = vsyncpa [#allocation3], 1
    %s793 = scalar_lea.sflag [#allocation3], 1
    %794 = vsyncpa %s793, 1

</llo_original>
